<compile_context>
chip_gen: v7x
topology: tpu7x:2x2x1
jax: 0.10.0
libtpu: 0.0.40
codegen_flags: <defaults>
</compile_context>

<pallas_src>
import functools

import jax
import jax.numpy as jnp
from jax.experimental import pallas as pl
from jax.experimental.pallas import tpu as pltpu

_D_IN = 76     # Linear(76, 32) input features
_H = 32        # hidden width
_H_PAD = 128   # hidden width padded to one lane-width (zero pad -> exact math)


def _mlp_kernel(x_ref, w1_ref, b1_ref, w2_ref, b2_ref, o_ref):
    # Layer 1: (TB, 76) @ (76, 128) + b1, then ReLU (MXU + VPU).
    h = jnp.dot(x_ref[...], w1_ref[...], preferred_element_type=jnp.float32)
    h = jnp.maximum(h + b1_ref[...], 0.0)
    # Layer 2: (TB, 128) @ (128, n_labels) + b2.
    o_ref[...] = (
        jnp.dot(h, w2_ref[...], preferred_element_type=jnp.float32) + b2_ref[...]
    )


def classifier_forward(x, w1, b1, w2, b2, *, n_labels, tile_rows=1024):
    """Forward pass matching the PyTorch Classifier.

    x  : any shape that flattens to (-1, 76), float32
    w1 : (32, 76)        PyTorch nn.Linear weight layout (out, in)
    b1 : (32,)
    w2 : (n_labels, 32)
    b2 : (n_labels,)
    returns: (B, n_labels) float32 where B = x.size / 76
    """
    xf = x.reshape(-1, _D_IN).astype(jnp.float32)
    B = xf.shape[0]

    # Batch tile: multiple of 8 sublanes, clamped to the (rounded-up) batch.
    TB = min(tile_rows, max(8, ((B + 7) // 8) * 8))
    B_pad = ((B + TB - 1) // TB) * TB
    if B_pad != B:
        xf = jnp.pad(xf, ((0, B_pad - B), (0, 0)))

    # Tiny one-time weight/bias padding (hidden dim -> 128 lanes). Zero padding is
    # exact: padded hidden units contribute 0 to layer 2.
    w1_p = jnp.zeros((_D_IN, _H_PAD), jnp.float32).at[:, :_H].set(
        jnp.asarray(w1, jnp.float32).T)
    b1_p = jnp.zeros((1, _H_PAD), jnp.float32).at[0, :_H].set(
        jnp.asarray(b1, jnp.float32))
    w2_p = jnp.zeros((_H_PAD, n_labels), jnp.float32).at[:_H, :].set(
        jnp.asarray(w2, jnp.float32).T)
    b2_p = jnp.asarray(b2, jnp.float32).reshape(1, n_labels)

    grid = (B_pad // TB,)
    out = pl.pallas_call(
        _mlp_kernel,
        out_shape=jax.ShapeDtypeStruct((B_pad, n_labels), jnp.float32),
        grid=grid,
        in_specs=[
            # x: tiled along batch, full (unpadded) feature dim.
            pl.BlockSpec((TB, _D_IN), lambda i: (i, 0)),
            # weights/biases: constant block index -> fetched once, VMEM-resident.
            pl.BlockSpec((_D_IN, _H_PAD), lambda i: (0, 0)),
            pl.BlockSpec((1, _H_PAD), lambda i: (0, 0)),
            pl.BlockSpec((_H_PAD, n_labels), lambda i: (0, 0)),
            pl.BlockSpec((1, n_labels), lambda i: (0, 0)),
        ],
        out_specs=pl.BlockSpec((TB, n_labels), lambda i: (i, 0)),
        compiler_params=pltpu.CompilerParams(
            dimension_semantics=("parallel",)),
    )(xf, w1_p, b1_p, w2_p, b2_p)

    return out[:B]


def _reference_forward(x, w1, b1, w2, b2):
    xf = x.reshape(-1, _D_IN).astype(jnp.float32)
    h = jnp.maximum(xf @ w1.T + b1, 0.0)
    return h @ w2.T + b2


if __name__ == "__main__":
    n_labels = 10

    key = jax.random.PRNGKey(0)
    k_x, k_w1, k_b1, k_w2, k_b2, k_x2 = jax.random.split(key, 6)

    # Deterministic parameters with PyTorch nn.Linear shapes.
    w1 = jax.random.uniform(k_w1, (32, 76), jnp.float32, -0.1, 0.1)
    b1 = jax.random.uniform(k_b1, (32,), jnp.float32, -0.1, 0.1)
    w2 = jax.random.uniform(k_w2, (n_labels, 32), jnp.float32, -0.1, 0.1)
    b2 = jax.random.uniform(k_b2, (n_labels,), jnp.float32, -0.1, 0.1)

    fwd = jax.jit(functools.partial(classifier_forward, n_labels=n_labels))

    # Test 1: small input that views to (-1, 76): (2, 4, 76) -> 8 rows.
    x = jax.random.normal(k_x, (2, 4, 76), dtype=jnp.float32)
    out = jax.block_until_ready(fwd(x, w1, b1, w2, b2))
    ref = _reference_forward(x, w1, b1, w2, b2)
    assert out.shape == (8, n_labels), out.shape
    assert jnp.allclose(out, ref, atol=1e-5, rtol=1e-5), "mismatch vs reference (small)"

    # Test 2: larger, non-tile-aligned batch to exercise multi-tile grid + row pad.
    x2 = jax.random.normal(k_x2, (2061, 76), dtype=jnp.float32)
    out2 = jax.block_until_ready(fwd(x2, w1, b1, w2, b2))
    ref2 = _reference_forward(x2, w1, b1, w2, b2)
    assert out2.shape == (2061, n_labels), out2.shape
    assert jnp.allclose(out2, ref2, atol=1e-5, rtol=1e-5), "mismatch vs reference (tiled)"

    print("KERNEL_OK")
</pallas_src>

<mosaic_0001>
module attributes {stable_mosaic.version = 11 : i64} {
  func.func @_mlp_kernel(%arg0: i32, %arg1: memref<8x76xf32, #tpu.memory_space<vmem>>, %arg2: memref<76x128xf32, #tpu.memory_space<vmem>>, %arg3: memref<1x128xf32, #tpu.memory_space<vmem>>, %arg4: memref<128x10xf32, #tpu.memory_space<vmem>>, %arg5: memref<1x10xf32, #tpu.memory_space<vmem>>, %arg6: memref<8x10xf32, #tpu.memory_space<vmem>>) attributes {dimension_semantics = [#tpu.dimension_semantics<parallel>], iteration_bounds = array<i64: 1>, scalar_prefetch = 0 : i64, scratch_operands = 0 : i64, tpu.core_type = #tpu.core_type<tc>, window_params = [{transform_indices = @transform_0, window_bounds = array<i64: 8, 76>}, {pipeline_mode = #tpu.pipeline_mode<synchronous>, transform_indices = @transform_1, window_bounds = array<i64: 76, 128>}, {pipeline_mode = #tpu.pipeline_mode<synchronous>, transform_indices = @transform_2, window_bounds = array<i64: 1, 128>}, {pipeline_mode = #tpu.pipeline_mode<synchronous>, transform_indices = @transform_3, window_bounds = array<i64: 128, 10>}, {pipeline_mode = #tpu.pipeline_mode<synchronous>, transform_indices = @transform_4, window_bounds = array<i64: 1, 10>}, {transform_indices = @transform_5, window_bounds = array<i64: 8, 10>}]} {
    %c0 = arith.constant 0 : index
    %c0_0 = arith.constant 0 : index
    %0 = vector.load %arg1[%c0, %c0_0] : memref<8x76xf32, #tpu.memory_space<vmem>>, vector<8x76xf32>
    %c0_1 = arith.constant 0 : index
    %c0_2 = arith.constant 0 : index
    %1 = vector.load %arg2[%c0_1, %c0_2] : memref<76x128xf32, #tpu.memory_space<vmem>>, vector<76x128xf32>
    %cst = arith.constant dense<0.000000e+00> : vector<8x128xf32>
    %2 = tpu.matmul %0, %1, %cst {dimension_numbers = #tpu.dot_dimension_numbers<[1], [0], [0], [1], [0, 0, 1, 1], [], []>} : vector<8x76xf32>, vector<76x128xf32>, vector<8x128xf32> -> vector<8x128xf32>
    %c0_3 = arith.constant 0 : index
    %c0_4 = arith.constant 0 : index
    %3 = vector.load %arg3[%c0_3, %c0_4] : memref<1x128xf32, #tpu.memory_space<vmem>>, vector<1x128xf32>
    %4 = vector.broadcast %3 : vector<1x128xf32> to vector<8x128xf32>
    %5 = arith.addf %2, %4 : vector<8x128xf32>
    %cst_5 = arith.constant 0.000000e+00 : f32
    %6 = vector.broadcast %cst_5 : f32 to vector<8x128xf32>
    %7 = arith.maximumf %5, %6 : vector<8x128xf32>
    %c0_6 = arith.constant 0 : index
    %c0_7 = arith.constant 0 : index
    %8 = vector.load %arg4[%c0_6, %c0_7] : memref<128x10xf32, #tpu.memory_space<vmem>>, vector<128x10xf32>
    %cst_8 = arith.constant dense<0.000000e+00> : vector<8x10xf32>
    %9 = tpu.matmul %7, %8, %cst_8 {dimension_numbers = #tpu.dot_dimension_numbers<[1], [0], [0], [1], [0, 0, 1, 1], [], []>} : vector<8x128xf32>, vector<128x10xf32>, vector<8x10xf32> -> vector<8x10xf32>
    %c0_9 = arith.constant 0 : index
    %c0_10 = arith.constant 0 : index
    %10 = vector.load %arg5[%c0_9, %c0_10] : memref<1x10xf32, #tpu.memory_space<vmem>>, vector<1x10xf32>
    %11 = vector.broadcast %10 : vector<1x10xf32> to vector<8x10xf32>
    %12 = arith.addf %9, %11 : vector<8x10xf32>
    %c0_11 = arith.constant 0 : index
    %c0_12 = arith.constant 0 : index
    %13 = vector.load %arg6[%c0_11, %c0_12] : memref<8x10xf32, #tpu.memory_space<vmem>>, vector<8x10xf32>
    tpu.vector_store %arg6[%c0_11, %c0_12], %12 {strides = array<i32>} : memref<8x10xf32, #tpu.memory_space<vmem>>, vector<8x10xf32>,
    return
  }
  func.func @transform_0(%arg0: i32) -> (i32, i32) {
    %c0_i32 = arith.constant 0 : i32
    %c0_i32_0 = arith.constant 0 : i32
    return %arg0, %c0_i32 : i32, i32
  }
  func.func @transform_1(%arg0: i32) -> (i32, i32) {
    %c0_i32 = arith.constant 0 : i32
    %c0_i32_0 = arith.constant 0 : i32
    %c0_i32_1 = arith.constant 0 : i32
    return %c0_i32, %c0_i32_0 : i32, i32
  }
  func.func @transform_2(%arg0: i32) -> (i32, i32) {
    %c0_i32 = arith.constant 0 : i32
    %c0_i32_0 = arith.constant 0 : i32
    %c0_i32_1 = arith.constant 0 : i32
    return %c0_i32, %c0_i32_0 : i32, i32
  }
  func.func @transform_3(%arg0: i32) -> (i32, i32) {
    %c0_i32 = arith.constant 0 : i32
    %c0_i32_0 = arith.constant 0 : i32
    %c0_i32_1 = arith.constant 0 : i32
    return %c0_i32, %c0_i32_0 : i32, i32
  }
  func.func @transform_4(%arg0: i32) -> (i32, i32) {
    %c0_i32 = arith.constant 0 : i32
    %c0_i32_0 = arith.constant 0 : i32
    %c0_i32_1 = arith.constant 0 : i32
    return %c0_i32, %c0_i32_0 : i32, i32
  }
  func.func @transform_5(%arg0: i32) -> (i32, i32) {
    %c0_i32 = arith.constant 0 : i32
    %c0_i32_0 = arith.constant 0 : i32
    return %arg0, %c0_i32 : i32, i32
  }
}

</mosaic_0001>

<llo_original>
// kernel: classifier_forward.1
$region0: #{classifier_forward.1}
  #allocation0 [shape = 'u32[]', space=smem, size = 0x4, offset = 0x4, fixed_abs, tag = 'smem constant byte address 0x4 - core index']
  #allocation1 [shape = 'u32[144,128]{1,0:T(1,128)}', space=vmem, size = 0x12000, scoped, tag = 'internal scratch']
  %s0 = inlined_call_operand.vmem [shape: f32[8,76], index: 0, kind: input, shape index: {}]
  %s1 = inlined_call_operand.vmem [shape: f32[76,128], index: 1, kind: input, shape index: {}]
  %s2 = inlined_call_operand.vmem [shape: f32[1,128], index: 2, kind: input, shape index: {}]
  %s3 = inlined_call_operand.vmem [shape: f32[128,10], index: 3, kind: input, shape index: {}]
  %s4 = inlined_call_operand.vmem [shape: f32[1,10], index: 4, kind: input, shape index: {}]
  %s5 = inlined_call_operand.hbm [shape: f32[8,10], index: 5, kind: output, shape index: {}]
  %s6 = sld [smem:[#allocation0]]
  $region30: #{classifier_forward.1} parent=0
    _
  %s8 = ssub.s32 1, %s6
  %s9 = scalar_select 0, %s8, %s6
  $region1: #{classifier_forward.1} parent=0
    #allocation2 [shape = 'u8[4096]{0}', space=vmem, size = 0x1000, scoped, tag = 'output window, operand 0, single buffered']
    #allocation3 [shape = 's32[1]{0}', space=sflag, size = 0x4, scoped, tag = 'scoped memory for classifier_forward.1']
    %10 = vsyncpa [#allocation3], 0
    // Predicated region
    $region2: #{classifier_forward.1} parent=1 // pred_check
      _
    $region3: #{classifier_forward.1} parent=1 // pred_check_branch
      %12 = sbr.rel (0) target = $region5
    $region4: #{classifier_forward.1} parent=1 // pred_region
      _
    $region5: #{classifier_forward.1} parent=1 // pred_fallthru
      _
    // Predicated region
    $region6: #{classifier_forward.1} parent=1 // pred_check
      _
    $region7: #{classifier_forward.1} parent=1 // pred_check_branch
      %14 = sbr.rel (0) target = $region9
    $region8: #{classifier_forward.1} parent=1 // pred_region
      _
    $region9: #{classifier_forward.1} parent=1 // pred_fallthru
      _
    // Predicated region
    $region10: #{classifier_forward.1} parent=1 // pred_check
      _
    $region11: #{classifier_forward.1} parent=1 // pred_check_branch
      %16 = sbr.rel (0) target = $region13
    $region12: #{classifier_forward.1} parent=1 // pred_region
      _
    $region13: #{classifier_forward.1} parent=1 // pred_fallthru
      _
    // Predicated region
    $region14: #{classifier_forward.1} parent=1 // pred_check
      _
    $region15: #{classifier_forward.1} parent=1 // pred_check_branch
      %18 = sbr.rel (0) target = $region17
    $region16: #{classifier_forward.1} parent=1 // pred_region
      _
    $region17: #{classifier_forward.1} parent=1 // pred_fallthru
      _
    // Predicated region
    $region18: #{classifier_forward.1} parent=1 // pred_check
      _
    $region19: #{classifier_forward.1} parent=1 // pred_check_branch
      %20 = sbr.rel (0) target = $region21
    $region20: #{classifier_forward.1} parent=1 // pred_region
      _
    $region21: #{classifier_forward.1} parent=1 // pred_fallthru
      _
    %v21 = vld [vmem:[%s0] sm:$0xff]
    %v22 = vld [vmem:[%s1] sm:$0xff]
    %v23 = vld [vmem:[%s1 + $0x8] sm:$0xff]
    %v24 = vld [vmem:[%s1 + $0x10] sm:$0xff]
    %v25 = vld [vmem:[%s1 + $0x18] sm:$0xff]
    %v26 = vld [vmem:[%s1 + $0x20] sm:$0xff]
    %v27 = vld [vmem:[%s1 + $0x28] sm:$0xff]
    %v28 = vld [vmem:[%s1 + $0x30] sm:$0xff]
    %v29 = vld [vmem:[%s1 + $0x38] sm:$0xff]
    %v30 = vld [vmem:[%s1 + $0x40] sm:$0xff]
    %v31 = vld [vmem:[%s1 + $0x48] sm:$0xf]
    %v32 = vld [vmem:[%s2] sm:$0x1]
    %v34 = vlaneseq
    %v35 = vshrl.u32 %v34, 7
    %v36 = vsub.s32 0, %v35
    %v37 = vrot.slane %v32, %v36
    %vm39 = vcmask 621568
    %v41 = vsel %vm39, %v21, 0
    %vm43 = vcmask 1043456
    %v45 = vsel %vm43, %v31, 0
    %47 = vmatprep.subr.mxu0 0.0
    %48 = vmatpush1.msra.mxu0 %v22
    %49 = vmatprep.subr.mxu0 0.0
    %50 = vmatpush1.msra.mxu0 %v23
    %51 = vmatprep.subr.mxu0 0.0
    %52 = vmatpush1.msra.mxu0 %v24
    %53 = vmatprep.subr.mxu0 0.0
    %54 = vmatpush1.msra.mxu0 %v25
    %55 = vmatprep.subr.mxu0 0.0
    %56 = vmatpush1.msra.mxu0 %v26
    %57 = vmatprep.subr.mxu0 0.0
    %58 = vmatpush1.msra.mxu0 %v27
    %59 = vmatprep.subr.mxu0 0.0
    %60 = vmatpush1.msra.mxu0 %v28
    %61 = vmatprep.subr.mxu0 0.0
    %62 = vmatpush1.msra.mxu0 %v29
    %63 = vmatprep.subr.mxu0 0.0
    %64 = vmatpush1.msra.mxu0 %v30
    %65 = vmatprep.subr.mxu0 0.0
    %66 = vmatpush1.msra.mxu0 %v45
    %67 = vmatprep.subr.mxu0 0.0
    %68 = vmatpush1.msra.mxu0 0.0
    %69 = vmatprep.subr.mxu0 0.0
    %70 = vmatpush1.msra.mxu0 0.0
    %71 = vmatprep.subr.mxu0 0.0
    %72 = vmatpush1.msra.mxu0 0.0
    %73 = vmatprep.subr.mxu0 0.0
    %74 = vmatpush1.msra.mxu0 0.0
    %75 = vmatprep.subr.mxu0 0.0
    %76 = vmatpush1.msra.mxu0 0.0
    %77 = vmatprep.subr.mxu0 0.0
    %78 = vmatpush1.msra.mxu0 0.0
    %79 = vmatprep.subr.mxu0 0.0
    %80 = vmatpush1.msra.mxu0 0.0
    %81 = vmatprep.subr.mxu0 0.0
    %82 = vmatpush1.msra.mxu0 0.0
    %83 = vmatprep.subr.mxu0 0.0
    %84 = vmatpush1.msra.mxu0 0.0
    %85 = vmatprep.subr.mxu0 0.0
    %86 = vmatpush1.msra.mxu0 0.0
    %87 = vmatprep.subr.mxu0 0.0
    %88 = vmatpush1.msra.mxu0 0.0
    %89 = vmatprep.subr.mxu0 0.0
    %90 = vmatpush1.msra.mxu0 0.0
    %91 = vmatprep.subr.mxu0 0.0
    %92 = vmatpush1.msra.mxu0 0.0
    %93 = vmatprep.subr.mxu0 0.0
    %94 = vmatpush1.msra.mxu0 0.0
    %95 = vmatprep.subr.mxu0 0.0
    %96 = vmatpush1.msra.mxu0 0.0
    %97 = vmatprep.subr.mxu0 0.0
    %98 = vmatpush1.msra.mxu0 0.0
    %99 = vmatprep.subr.mxu0 0.0
    %100 = vmatpush1.msra.mxu0 0.0
    %101 = vmatprep.subr.mxu0 0.0
    %102 = vmatpush1.msra.mxu0 0.0
    %103 = vmatprep.subr.mxu0 0.0
    %104 = vmatpush1.msra.mxu0 0.0
    %105 = vmatprep.subr.mxu0 0.0
    %106 = vmatpush1.msra.mxu0 0.0
    %107 = vmatprep.subr.mxu0 0.0
    %108 = vmatpush1.msra.mxu0 0.0
    %109 = vmatprep.subr.mxu0 0.0
    %110 = vmatpush1.msra.mxu0 0.0
    %111 = vmatprep.mubr.f32.mxu0 0.0
    %112 = vmatmul.mubr.f32.gmra.mrb[0].mxu0 %v41
    %v113 = vpop.f32.mrb[0].mxu0
    %v114 = vadd.f32 %v37, %v113
    %v115 = vpop.f32.mrb[0].mxu0
    %116 = vdwg.mxu0
    %v117 = vmax.f32 %v114, 0.0
    %v118 = vld [vmem:[%s3] sm:$0xff]
    %v119 = vld [vmem:[%s3 + $0x8] sm:$0xff]
    %v120 = vld [vmem:[%s3 + $0x10] sm:$0xff]
    %v121 = vld [vmem:[%s3 + $0x18] sm:$0xff]
    %v122 = vld [vmem:[%s3 + $0x20] sm:$0xff]
    %v123 = vld [vmem:[%s3 + $0x28] sm:$0xff]
    %v124 = vld [vmem:[%s3 + $0x30] sm:$0xff]
    %v125 = vld [vmem:[%s3 + $0x38] sm:$0xff]
    %v126 = vld [vmem:[%s3 + $0x40] sm:$0xff]
    %v127 = vld [vmem:[%s3 + $0x48] sm:$0xff]
    %v128 = vld [vmem:[%s3 + $0x50] sm:$0xff]
    %v129 = vld [vmem:[%s3 + $0x58] sm:$0xff]
    %v130 = vld [vmem:[%s3 + $0x60] sm:$0xff]
    %v131 = vld [vmem:[%s3 + $0x68] sm:$0xff]
    %v132 = vld [vmem:[%s3 + $0x70] sm:$0xff]
    %v133 = vld [vmem:[%s3 + $0x78] sm:$0xff]
    %v134 = vld [vmem:[%s4] sm:$0x1]
    %v136 = vlaneseq
    %v137 = vshrl.u32 %v136, 7
    %v138 = vsub.s32 0, %v137
    %v139 = vrot.slane %v134, %v138
    %141 = vmatprep.subr.mxu0 0.0
    %142 = vmatpush1.msra.mxu0 %v118
    %143 = vmatprep.subr.mxu0 0.0
    %144 = vmatpush1.msra.mxu0 %v119
    %145 = vmatprep.subr.mxu0 0.0
    %146 = vmatpush1.msra.mxu0 %v120
    %147 = vmatprep.subr.mxu0 0.0
    %148 = vmatpush1.msra.mxu0 %v121
    %149 = vmatprep.subr.mxu0 0.0
    %150 = vmatpush1.msra.mxu0 %v122
    %151 = vmatprep.subr.mxu0 0.0
    %152 = vmatpush1.msra.mxu0 %v123
    %153 = vmatprep.subr.mxu0 0.0
    %154 = vmatpush1.msra.mxu0 %v124
    %155 = vmatprep.subr.mxu0 0.0
    %156 = vmatpush1.msra.mxu0 %v125
    %157 = vmatprep.subr.mxu0 0.0
    %158 = vmatpush1.msra.mxu0 %v126
    %159 = vmatprep.subr.mxu0 0.0
    %160 = vmatpush1.msra.mxu0 %v127
    %161 = vmatprep.subr.mxu0 0.0
    %162 = vmatpush1.msra.mxu0 %v128
    %163 = vmatprep.subr.mxu0 0.0
    %164 = vmatpush1.msra.mxu0 %v129
    %165 = vmatprep.subr.mxu0 0.0
    %166 = vmatpush1.msra.mxu0 %v130
    %167 = vmatprep.subr.mxu0 0.0
    %168 = vmatpush1.msra.mxu0 %v131
    %169 = vmatprep.subr.mxu0 0.0
    %170 = vmatpush1.msra.mxu0 %v132
    %171 = vmatprep.subr.mxu0 0.0
    %172 = vmatpush1.msra.mxu0 %v133
    %173 = vmatprep.subr.mxu0 0.0
    %174 = vmatpush1.msra.mxu0 0.0
    %175 = vmatprep.subr.mxu0 0.0
    %176 = vmatpush1.msra.mxu0 0.0
    %177 = vmatprep.subr.mxu0 0.0
    %178 = vmatpush1.msra.mxu0 0.0
    %179 = vmatprep.subr.mxu0 0.0
    %180 = vmatpush1.msra.mxu0 0.0
    %181 = vmatprep.subr.mxu0 0.0
    %182 = vmatpush1.msra.mxu0 0.0
    %183 = vmatprep.subr.mxu0 0.0
    %184 = vmatpush1.msra.mxu0 0.0
    %185 = vmatprep.subr.mxu0 0.0
    %186 = vmatpush1.msra.mxu0 0.0
    %187 = vmatprep.subr.mxu0 0.0
    %188 = vmatpush1.msra.mxu0 0.0
    %189 = vmatprep.subr.mxu0 0.0
    %190 = vmatpush1.msra.mxu0 0.0
    %191 = vmatprep.subr.mxu0 0.0
    %192 = vmatpush1.msra.mxu0 0.0
    %193 = vmatprep.subr.mxu0 0.0
    %194 = vmatpush1.msra.mxu0 0.0
    %195 = vmatprep.subr.mxu0 0.0
    %196 = vmatpush1.msra.mxu0 0.0
    %197 = vmatprep.subr.mxu0 0.0
    %198 = vmatpush1.msra.mxu0 0.0
    %199 = vmatprep.subr.mxu0 0.0
    %200 = vmatpush1.msra.mxu0 0.0
    %201 = vmatprep.subr.mxu0 0.0
    %202 = vmatpush1.msra.mxu0 0.0
    %203 = vmatprep.subr.mxu0 0.0
    %204 = vmatpush1.msra.mxu0 0.0
    %205 = vmatprep.mubr.f32.mxu0 0.0
    %206 = vmatmul.mubr.f32.gmra.mrb[0].mxu0 %v117
    %v207 = vpop.f32.mrb[0].mxu0
    %v208 = vadd.f32 %v139, %v207
    %v209 = vpop.f32.mrb[0].mxu0
    %210 = vdwg.mxu0
    %vm211 = vcmask 80896
    %212 = vst.msk [vmem:[#allocation2] sm:$0xff] %vm211, %v208
    // Predicated region
    $region22: #{classifier_forward.1} parent=1 // pred_check
      _
    $region23: #{classifier_forward.1} parent=1 // pred_check_branch
      %214 = sbr.rel (0) target = $region25
    $region24: #{classifier_forward.1} parent=1 // pred_region
      %s216 = ssub.s32 128, 128
      %217 = vsyncadd [#allocation3], %s216
      %s219 = sshll.u32 [#allocation2], 4
      %s220 = int_to_ptr.vmem [resolvable:$true] %s219
      %222 = dma.vmem_to_hbm [thread:$0]  %s220, 128, %s5, [#allocation3]
    $region25: #{classifier_forward.1} parent=1 // pred_fallthru
      _
    // Predicated region
    $region26: #{classifier_forward.1} parent=1 // pred_check
      _
    $region27: #{classifier_forward.1} parent=1 // pred_check_branch
      %224 = sbr.rel (0) target = $region29
    $region28: #{classifier_forward.1} parent=1 // pred_region
      %225 = dma.done [#allocation3], 128
    $region29: #{classifier_forward.1} parent=1 // pred_fallthru
      _
    %226 = vsyncpa [#allocation3], 1

</llo_original>
